<compile_context>
chip_gen: v7x
topology: tpu7x:2x2x1
jax: 0.10.0
libtpu: 0.0.40
codegen_flags: <defaults>
</compile_context>

<pallas_src>
import functools

import jax
import jax.numpy as jnp
from jax import lax
from jax.experimental import pallas as pl
from jax.experimental.pallas import tpu as pltpu


def _round_up(x, m):
    return ((x + m - 1) // m) * m


def _round_down(x, m):
    return (x // m) * m


def _cdiv(a, b):
    return (a + b - 1) // b


def _make_ws_kernel(*, n_valid, tn, tc, n_chunks, steps_per_split):
    """Builds the kernel with the (static) tiling geometry closed over."""

    def kernel(h_ref, idx_ref, w_ref, lw_ref, lb_ref, o_ref, acc_ref):
        # h_ref:   [TN, in_dim]     input dtype (f32 or bf16) - node features
        # idx_ref: [1, TN]          int32 scatter targets (-1 in padding)
        # w_ref:   [1, TN]          f32 per-node weights (0 in padding)
        # lw_ref:  [in_dim, OD_pad] bf16 Linear weight (transposed, padded)
        # lb_ref:  [1, OD_pad]      f32 Linear bias (padded)
        # o_ref:   [1, M_pad, OD_pad] f32 per-split output (resident over N)
        # acc_ref: [M_pad, in_dim]  f32 scatter accumulator scratch
        split = pl.program_id(0)
        step = pl.program_id(1)
        m_pad = acc_ref.shape[0]

        @pl.when(step == 0)
        def _init():
            acc_ref[...] = jnp.zeros_like(acc_ref)

        tile_start = (split * steps_per_split + step) * tn

        def do_chunk(off):
            # Rows of this chunk that actually exist in the (unpadded) input.
            rows_left = n_valid - tile_start - off
            # Weighted one-hot scatter matrix in MXU-native [M_pad, tc]
            # orientation: onehot[m, n] = w[n] if idx[n] == m else 0.
            # Padded idx (-1) / w (0) columns contribute exact zeros.
            idx_c = idx_ref[0:1, pl.ds(off, tc)]
            w_c = w_ref[0:1, pl.ds(off, tc)]
            row_ids = lax.broadcasted_iota(jnp.int32, (m_pad, tc), 0)
            onehot = jnp.where(row_ids == idx_c, w_c, 0.0).astype(jnp.bfloat16)
            # Zero garbage rows past the end of h (partial last tile) so the
            # masked one-hot never multiplies NaN/Inf garbage.
            h_c = h_ref[pl.ds(off, tc), :]
            row_ok = lax.broadcasted_iota(jnp.int32, (tc, 1), 0) < rows_left
            h_c = jnp.where(row_ok, h_c, jnp.zeros_like(h_c)).astype(jnp.bfloat16)
            # Scatter-add of this chunk: acc += onehot @ h (bf16 MXU, f32 acc).
            acc_ref[...] += jnp.dot(onehot, h_c,
                                    preferred_element_type=jnp.float32)

        if n_chunks == 1:
            do_chunk(0)
        else:
            def body(c, carry):
                do_chunk(pl.multiple_of(c * tc, tc))
                return carry
            lax.fori_loop(0, n_chunks, body, 0, unroll=(n_chunks <= 8))

        @pl.when(step == pl.num_programs(1) - 1)
        def _epilogue():
            # bf16 x bf16 -> f32 Linear; bias added exactly once (split 0),
            # the wrapper sums the per-split partial outputs.
            out = jnp.dot(acc_ref[...].astype(jnp.bfloat16), lw_ref[...],
                          preferred_element_type=jnp.float32)
            out = out + jnp.where(split == 0, lb_ref[...], 0.0)
            o_ref[0] = out.astype(o_ref.dtype)

    return kernel


@functools.partial(jax.jit,
                   static_argnames=("num_out", "tile_bytes", "onehot_bytes"))
def ws_forward(h, idx, w, lin_w, lin_b, *, num_out,
               tile_bytes=4 * 1024 * 1024, onehot_bytes=2 * 1024 * 1024):
    """WS.forward: lin(scatter_sum(repeat(w)[:, None] * h, idx))."""
    N, in_dim = h.shape
    out_dim = lin_w.shape[0]
    n_w = w.shape[0]
    if N % n_w != 0:
        raise ValueError("len(h) must be a multiple of len(w) "
                         "(torch .repeat would fail otherwise)")
    h_bytes = jnp.dtype(h.dtype).itemsize   # caller may pass bf16 h directly

    m_pad = _round_up(num_out, 8)
    od_pad = _round_up(out_dim, 128)

    # --- tiling geometry -----------------------------------------------------
    # Inner MXU chunk: keeps the [m_pad, tc] one-hot temp within budget.
    tc = max(256, _round_down(onehot_bytes // (m_pad * 4), 256))
    # Grid tile along N: sized from the h-tile byte budget, 256-aligned,
    # a multiple of the inner chunk, and no bigger than needed.
    tn = max(256, _round_down(tile_bytes // (in_dim * h_bytes), 256))
    tn = min(tn, _round_up(N, 256))
    tc = min(tc, tn)
    tn = _round_up(tn, tc)

    # --- VMEM budget: clamp to the real chip, shrink tn if it would not fit --
    try:
        vmem_cap = int(pltpu.get_tpu_info().vmem_capacity_bytes)
    except Exception:
        vmem_cap = 64 * 1024 * 1024          # conservative (v7x per-core)
    headroom = 2 * 1024 * 1024

    def est_vmem(tn_):
        return (3 * tn_ * in_dim * h_bytes            # h tile pipeline buffers
                + 2 * 2 * tn_ * 4                     # idx + w double buffers
                + in_dim * od_pad * 2 + od_pad * 4    # lw (bf16) + lb (f32)
                + m_pad * in_dim * 4                  # f32 accumulator
                + 2 * m_pad * od_pad * 4              # resident output block
                + m_pad * tc * 6 + tc * in_dim * 6)   # one-hot / masked-h temps

    while est_vmem(tn) > vmem_cap - headroom and tn > tc:
        tn = max(tc, _round_down(tn // 2, tc))
    # TODO(synk): if m_pad * (in_dim + od_pad) * 4 itself approaches ~half of
    # VMEM (very large num_out), add an M-blocking grid axis so acc/out shrink
    # per step and keep lw in HBM (memory_space=pl.ANY) with a manual DMA.

    n_steps_total = _cdiv(N, tn)
    n_splits = 2 if n_steps_total >= 2 else 1          # v7x megacore split
    steps_per_split = _cdiv(n_steps_total, n_splits)
    n_cover = n_splits * steps_per_split * tn
    n_chunks = tn // tc
    vmem_limit = int(min(vmem_cap - headroom,
                         max(32 * 1024 * 1024, 2 * est_vmem(tn))))

    # --- input layout: h is NOT padded/copied unless one tile exceeds it ------
    if tn > N:
        h_in = jnp.zeros((tn, in_dim), h.dtype).at[:N].set(h)   # tiny-N fallback
    else:
        h_in = h            # ragged last tile handled by in-kernel masking
    n_h_blocks = _cdiv(h_in.shape[0], tn)

    # idx / w are tiny; pad them to the full grid coverage (-1 / 0 never scatter).
    # (Merging idx+w into one int32 stream would save one small DMA per step,
    #  but with fat tiles the descriptor overhead is negligible.)
    w_rep = jnp.tile(w.astype(jnp.float32), N // n_w)                      # [N]
    idx_p = jnp.full((1, n_cover), -1, jnp.int32).at[0, :N].set(idx.astype(jnp.int32))
    w_p = jnp.zeros((1, n_cover), jnp.float32).at[0, :N].set(w_rep)
    lw_p = jnp.zeros((in_dim, od_pad), jnp.bfloat16).at[:, :out_dim].set(
        lin_w.T.astype(jnp.bfloat16))
    lb_p = jnp.zeros((1, od_pad), jnp.float32).at[0, :out_dim].set(
        lin_b.astype(jnp.float32))

    kernel = _make_ws_kernel(n_valid=N, tn=tn, tc=tc, n_chunks=n_chunks,
                             steps_per_split=steps_per_split)

    flops = 2 * n_cover * m_pad * in_dim + n_splits * 2 * m_pad * in_dim * od_pad
    bytes_accessed = (h_in.size * h_bytes + idx_p.size * 4 + w_p.size * 4
                      + lw_p.size * 2 + lb_p.size * 4
                      + n_splits * m_pad * od_pad * 4)

    def h_map(c, i):
        # Clamp so a fully-dead trailing step (odd step count split in two)
        # re-reads the last real block; its contribution is masked to zero.
        return (jnp.minimum(c * steps_per_split + i, n_h_blocks - 1), 0)

    out_parts = pl.pallas_call(
        kernel,
        out_shape=jax.ShapeDtypeStruct((n_splits, m_pad, od_pad), jnp.float32),
        grid_spec=pltpu.PrefetchScalarGridSpec(
            num_scalar_prefetch=0,
            grid=(n_splits, steps_per_split),
            in_specs=[
                pl.BlockSpec((tn, in_dim), h_map),                              # h tile
                pl.BlockSpec((1, tn), lambda c, i: (0, c * steps_per_split + i)),  # idx
                pl.BlockSpec((1, tn), lambda c, i: (0, c * steps_per_split + i)),  # w
                pl.BlockSpec((in_dim, od_pad), lambda c, i: (0, 0)),            # Linear W^T
                pl.BlockSpec((1, od_pad), lambda c, i: (0, 0)),                 # Linear bias
            ],
            out_specs=pl.BlockSpec((1, m_pad, od_pad), lambda c, i: (c, 0, 0)),
            scratch_shapes=[pltpu.VMEM((m_pad, in_dim), jnp.float32)],
        ),
        compiler_params=pltpu.CompilerParams(
            dimension_semantics=("parallel", "arbitrary"),
            vmem_limit_bytes=vmem_limit),
        cost_estimate=pl.CostEstimate(flops=flops, transcendentals=0,
                                      bytes_accessed=bytes_accessed),
    )(h_in, idx_p, w_p, lw_p, lb_p)

    # Sum the per-split partial outputs (bias was added exactly once), unpad.
    out = out_parts.sum(axis=0)
    return out[:num_out, :out_dim].astype(h.dtype)


if __name__ == "__main__":
    # Small shapes consistent with the module.  N chosen so the forced-small
    # tile configs below exercise multi-step accumulation, the 2-way parallel
    # split, the ragged (masked) unpadded tail and the dead-step clamp.
    n_in_nodes = 4
    in_dim = 32
    out_dim = 16
    N = 700          # len(h); multiple of n_in_nodes
    num_out = 4      # number of scatter target rows (idx.max()+1)

    key = jax.random.PRNGKey(0)
    k_w, k_lw, k_lb, k_h, k_idx = jax.random.split(key, 5)

    # Deterministic parameter init (matching shapes from __init__).
    w = jax.random.uniform(k_w, (n_in_nodes,), dtype=jnp.float32)      # th.rand
    bound = 1.0 / (in_dim ** 0.5)                                      # nn.Linear default
    lin_w = jax.random.uniform(k_lw, (out_dim, in_dim), jnp.float32,
                               minval=-bound, maxval=bound)
    lin_b = jax.random.uniform(k_lb, (out_dim,), jnp.float32,
                               minval=-bound, maxval=bound)

    # Inputs (f32, as in the PyTorch module; bf16 h is also accepted).
    h = jax.random.normal(k_h, (N, in_dim), dtype=jnp.float32)
    idx = jax.random.randint(k_idx, (N,), 0, num_out, dtype=jnp.int32)

    # Pure-JAX reference with the same bf16 roundings as the kernel's MXU path.
    h_q = h.astype(jnp.bfloat16).astype(jnp.float32)
    w_q = jnp.tile(w, N // n_in_nodes).astype(jnp.bfloat16).astype(jnp.float32)[:, None]
    scat = jax.ops.segment_sum(w_q * h_q, idx, num_segments=num_out)
    ref = (scat.astype(jnp.bfloat16).astype(jnp.float32)
           @ lin_w.T.astype(jnp.bfloat16).astype(jnp.float32) + lin_b)

    # Three tiling configs: (A) defaults -> one fat tile (tiny-N padded path),
    # (B) small tile -> grid (2,2): multi-step acc + split + masked tail,
    # (C) medium tile + small one-hot budget -> in-kernel chunked fori_loop.
    configs = [
        dict(),                                                          # A
        dict(tile_bytes=256 * in_dim * 4),                               # B
        dict(tile_bytes=512 * in_dim * 4, onehot_bytes=8 * 256 * 4),     # C
    ]
    for cfg in configs:
        out = ws_forward(h, idx, w, lin_w, lin_b, num_out=num_out, **cfg)
        out = jax.block_until_ready(out)
        assert out.shape == (num_out, out_dim)
        # Each split rounds its partial accumulator to bf16 independently, so
        # allow slightly looser tolerance than one bf16 rounding.
        assert jnp.allclose(out, ref, atol=5e-2, rtol=5e-2), \
            f"mismatch vs JAX reference for config {cfg}"

    print("KERNEL_OK")
</pallas_src>

<mosaic_0001>
module attributes {stable_mosaic.version = 11 : i64} {
  func.func @kernel(%arg0: i32, %arg1: i32, %arg2: memref<768x32xf32, #tpu.memory_space<vmem>>, %arg3: memref<1x768xi32, #tpu.memory_space<vmem>>, %arg4: memref<1x768xf32, #tpu.memory_space<vmem>>, %arg5: memref<32x128xbf16, #tpu.memory_space<vmem>>, %arg6: memref<1x128xf32, #tpu.memory_space<vmem>>, %arg7: memref<1x8x128xf32, #tpu.memory_space<vmem>>, %arg8: memref<8x32xf32, #tpu.memory_space<vmem>>) attributes {dimension_semantics = [#tpu.dimension_semantics<parallel>, #tpu.dimension_semantics<arbitrary>], iteration_bounds = array<i64: 1, 1>, scalar_prefetch = 0 : i64, scratch_operands = 1 : i64, tpu.core_type = #tpu.core_type<tc>, window_params = [{transform_indices = @transform_0, window_bounds = array<i64: 768, 32>}, {transform_indices = @transform_1, window_bounds = array<i64: 1, 768>}, {transform_indices = @transform_2, window_bounds = array<i64: 1, 768>}, {pipeline_mode = #tpu.pipeline_mode<synchronous>, transform_indices = @transform_3, window_bounds = array<i64: 32, 128>}, {pipeline_mode = #tpu.pipeline_mode<synchronous>, transform_indices = @transform_4, window_bounds = array<i64: 1, 128>}, {transform_indices = @transform_5, window_bounds = array<i64: 1, 8, 128>}]} {
    %c0_i32 = arith.constant 0 : i32
    %0 = arith.cmpi eq, %arg1, %c0_i32 : i32
    %1 = arith.extui %0 : i1 to i32
    %c0_i32_0 = arith.constant 0 : i32
    %2 = arith.cmpi ne, %1, %c0_i32_0 : i32
    scf.if %2 {
      %cst_15 = arith.constant 0.000000e+00 : f32
      %34 = vector.broadcast %cst_15 : f32 to vector<8x32xf32>
      %c0_16 = arith.constant 0 : index
      %c0_17 = arith.constant 0 : index
      %35 = vector.load %arg8[%c0_16, %c0_17] : memref<8x32xf32, #tpu.memory_space<vmem>>, vector<8x32xf32>
      tpu.vector_store %arg8[%c0_16, %c0_17], %34 {strides = array<i32>} : memref<8x32xf32, #tpu.memory_space<vmem>>, vector<8x32xf32>,
    } else {
    }
    %c1_i32 = arith.constant 1 : i32
    %3 = arith.muli %arg0, %c1_i32 : i32
    %4 = arith.addi %3, %arg1 : i32
    %c768_i32 = arith.constant 768 : i32
    %5 = arith.muli %4, %c768_i32 : i32
    %c700_i32 = arith.constant 700 : i32
    %6 = arith.subi %c700_i32, %5 : i32
    %c0_i32_1 = arith.constant 0 : i32
    %7 = arith.subi %6, %c0_i32_1 : i32
    %c0 = arith.constant 0 : index
    %c0_2 = arith.constant 0 : index
    %8 = vector.load %arg3[%c0, %c0_2] : memref<1x768xi32, #tpu.memory_space<vmem>>, vector<1x768xi32>
    %c0_3 = arith.constant 0 : index
    %c0_4 = arith.constant 0 : index
    %9 = vector.load %arg4[%c0_3, %c0_4] : memref<1x768xf32, #tpu.memory_space<vmem>>, vector<1x768xf32>
    %10 = tpu.iota {dimensions = array<i32: 0>} : vector<8x768xi32>
    %11 = vector.broadcast %8 : vector<1x768xi32> to vector<8x768xi32>
    %12 = arith.cmpi eq, %10, %11 : vector<8x768xi32>
    %cst = arith.constant 0.000000e+00 : f32
    %13 = vector.shape_cast %9 : vector<1x768xf32> to vector<1x768xf32>
    %14 = vector.broadcast %13 : vector<1x768xf32> to vector<8x768xf32>
    %15 = vector.broadcast %cst : f32 to vector<8x768xf32>
    %16 = arith.select %12, %14, %15 : vector<8x768xi1>, vector<8x768xf32>
    %17 = arith.truncf %16 : vector<8x768xf32> to vector<8x768xbf16>
    %c0_5 = arith.constant 0 : index
    %c0_6 = arith.constant 0 : index
    %18 = vector.load %arg2[%c0_5, %c0_6] : memref<768x32xf32, #tpu.memory_space<vmem>>, vector<768x32xf32>
    %19 = tpu.iota {dimensions = array<i32: 0>} : vector<768x1xi32>
    %20 = vector.broadcast %7 : i32 to vector<768x1xi32>
    %21 = arith.cmpi slt, %19, %20 : vector<768x1xi32>
    %cst_7 = arith.constant 0.000000e+00 : f32
    %22 = vector.broadcast %cst_7 : f32 to vector<768x32xf32>
    %23 = vector.shape_cast %21 : vector<768x1xi1> to vector<768x1xi1>
    %24 = vector.broadcast %23 : vector<768x1xi1> to vector<768x32xi1>
    %25 = arith.select %24, %18, %22 : vector<768x32xi1>, vector<768x32xf32>
    %26 = arith.truncf %25 : vector<768x32xf32> to vector<768x32xbf16>
    %c0_8 = arith.constant 0 : index
    %c0_9 = arith.constant 0 : index
    %27 = vector.load %arg8[%c0_8, %c0_9] : memref<8x32xf32, #tpu.memory_space<vmem>>, vector<8x32xf32>
    %cst_10 = arith.constant dense<0.000000e+00> : vector<8x32xf32>
    %28 = tpu.matmul %17, %26, %cst_10 {dimension_numbers = #tpu.dot_dimension_numbers<[1], [0], [0], [1], [0, 0, 1, 1], [], []>} : vector<8x768xbf16>, vector<768x32xbf16>, vector<8x32xf32> -> vector<8x32xf32>
    %29 = arith.addf %27, %28 : vector<8x32xf32>
    %c0_11 = arith.constant 0 : index
    %c0_12 = arith.constant 0 : index
    %30 = vector.load %arg8[%c0_11, %c0_12] : memref<8x32xf32, #tpu.memory_space<vmem>>, vector<8x32xf32>
    tpu.vector_store %arg8[%c0_11, %c0_12], %29 {strides = array<i32>} : memref<8x32xf32, #tpu.memory_space<vmem>>, vector<8x32xf32>,
    %c0_i32_13 = arith.constant 0 : i32
    %31 = arith.cmpi eq, %arg1, %c0_i32_13 : i32
    %32 = arith.extui %31 : i1 to i32
    %c0_i32_14 = arith.constant 0 : i32
    %33 = arith.cmpi ne, %32, %c0_i32_14 : i32
    scf.if %33 {
      %c0_15 = arith.constant 0 : index
      %c0_16 = arith.constant 0 : index
      %34 = vector.load %arg8[%c0_15, %c0_16] : memref<8x32xf32, #tpu.memory_space<vmem>>, vector<8x32xf32>
      %35 = arith.truncf %34 : vector<8x32xf32> to vector<8x32xbf16>
      %c0_17 = arith.constant 0 : index
      %c0_18 = arith.constant 0 : index
      %36 = vector.load %arg5[%c0_17, %c0_18] : memref<32x128xbf16, #tpu.memory_space<vmem>>, vector<32x128xbf16>
      %cst_19 = arith.constant dense<0.000000e+00> : vector<8x128xf32>
      %37 = tpu.matmul %35, %36, %cst_19 {dimension_numbers = #tpu.dot_dimension_numbers<[1], [0], [0], [1], [0, 0, 1, 1], [], []>} : vector<8x32xbf16>, vector<32x128xbf16>, vector<8x128xf32> -> vector<8x128xf32>
      %c0_i32_20 = arith.constant 0 : i32
      %38 = arith.cmpi eq, %arg0, %c0_i32_20 : i32
      %c0_21 = arith.constant 0 : index
      %c0_22 = arith.constant 0 : index
      %39 = vector.load %arg6[%c0_21, %c0_22] : memref<1x128xf32, #tpu.memory_space<vmem>>, vector<1x128xf32>
      %cst_23 = arith.constant 0.000000e+00 : f32
      %40 = vector.broadcast %cst_23 : f32 to vector<1x128xf32>
      %41 = arith.select %38, %39, %40 : vector<1x128xf32>
      %42 = vector.broadcast %41 : vector<1x128xf32> to vector<8x128xf32>
      %43 = arith.addf %37, %42 : vector<8x128xf32>
      %c0_24 = arith.constant 0 : index
      %c0_25 = arith.constant 0 : index
      %c0_26 = arith.constant 0 : index
      %44 = vector.load %arg7[%c0_24, %c0_25, %c0_26] : memref<1x8x128xf32, #tpu.memory_space<vmem>>, vector<1x8x128xf32>
      %45 = vector.shape_cast %44 : vector<1x8x128xf32> to vector<8x128xf32>
      %46 = vector.shape_cast %43 : vector<8x128xf32> to vector<1x8x128xf32>
      tpu.vector_store %arg7[%c0_24, %c0_25, %c0_26], %46 {strides = array<i32>} : memref<1x8x128xf32, #tpu.memory_space<vmem>>, vector<1x8x128xf32>,
    } else {
    }
    return
  }
  func.func @transform_0(%arg0: i32, %arg1: i32) -> (i32, i32) {
    %c1_i32 = arith.constant 1 : i32
    %0 = arith.muli %arg0, %c1_i32 : i32
    %1 = arith.addi %0, %arg1 : i32
    %c0_i32 = arith.constant 0 : i32
    %2 = arith.minsi %1, %c0_i32 : i32
    %c0_i32_0 = arith.constant 0 : i32
    %c0_i32_1 = arith.constant 0 : i32
    return %2, %c0_i32_0 : i32, i32
  }
  func.func @transform_1(%arg0: i32, %arg1: i32) -> (i32, i32) {
    %c1_i32 = arith.constant 1 : i32
    %0 = arith.muli %arg0, %c1_i32 : i32
    %1 = arith.addi %0, %arg1 : i32
    %c0_i32 = arith.constant 0 : i32
    %c0_i32_0 = arith.constant 0 : i32
    return %c0_i32, %1 : i32, i32
  }
  func.func @transform_2(%arg0: i32, %arg1: i32) -> (i32, i32) {
    %c1_i32 = arith.constant 1 : i32
    %0 = arith.muli %arg0, %c1_i32 : i32
    %1 = arith.addi %0, %arg1 : i32
    %c0_i32 = arith.constant 0 : i32
    %c0_i32_0 = arith.constant 0 : i32
    return %c0_i32, %1 : i32, i32
  }
  func.func @transform_3(%arg0: i32, %arg1: i32) -> (i32, i32) {
    %c0_i32 = arith.constant 0 : i32
    %c0_i32_0 = arith.constant 0 : i32
    %c0_i32_1 = arith.constant 0 : i32
    return %c0_i32, %c0_i32_0 : i32, i32
  }
  func.func @transform_4(%arg0: i32, %arg1: i32) -> (i32, i32) {
    %c0_i32 = arith.constant 0 : i32
    %c0_i32_0 = arith.constant 0 : i32
    %c0_i32_1 = arith.constant 0 : i32
    return %c0_i32, %c0_i32_0 : i32, i32
  }
  func.func @transform_5(%arg0: i32, %arg1: i32) -> (i32, i32, i32) {
    %c0_i32 = arith.constant 0 : i32
    %c0_i32_0 = arith.constant 0 : i32
    %c0_i32_1 = arith.constant 0 : i32
    return %arg0, %c0_i32, %c0_i32_0 : i32, i32, i32
  }
}

</mosaic_0001>

<llo_original>
// kernel: ws_forward.1
$region0: #{ws_forward.1}
  #allocation0 [shape = 'u32[]', space=smem, size = 0x4, offset = 0x4, fixed_abs, tag = 'smem constant byte address 0x4 - core index']
  #allocation1 [shape = 'u32[144,128]{1,0:T(1,128)}', space=vmem, size = 0x12000, scoped, tag = 'internal scratch']
  #allocation2 [shape = 'f32[8,32]{1,0:T(8,128)}', space=vmem, size = 0x1000, scoped, tag = 'scratch operand']
  %s0 = inlined_call_operand.vmem [shape: f32[768,32], index: 0, kind: input, shape index: {}]
  %s1 = inlined_call_operand.vmem [shape: s32[1,768], index: 1, kind: input, shape index: {}]
  %s2 = inlined_call_operand.vmem [shape: f32[1,768], index: 2, kind: input, shape index: {}]
  %s3 = inlined_call_operand.vmem [shape: bf16[32,128], index: 3, kind: input, shape index: {}]
  %s4 = inlined_call_operand.vmem [shape: f32[1,128], index: 4, kind: input, shape index: {}]
  %s5 = inlined_call_operand.vmem [shape: f32[1,8,128], index: 5, kind: output, shape index: {}]
  %s6 = sld [smem:[#allocation0]]
  $region38: #{ws_forward.1} parent=0
    _
  %s8 = ssub.s32 1, %s6
  %s9 = scalar_select 0, %s8, %s6
  // Predicated region
  $region2: #{ws_forward.1} parent=0 // pred_check
    _
  $region3: #{ws_forward.1} parent=0 // pred_check_branch
    %11 = sbr.rel (0) target = $region5
  $region4: #{ws_forward.1} parent=0 // pred_region
    %s12 = sadd.s32 0, 0
    %p13 = scmp.lt.s32.totalorder %s12, 0
    %s14 = scalar_select %p13, %s12, 0
    %s15 = smul.u32 96, %s14
    %p16 = scmp.lt.s32.totalorder %s15, 95
    %s17 = scalar_select %p16, %s15, 95
    %s18 = smul.addr %s17, 8
    %s19 = scalar_lea.vmem %s0, %s18
    %s20 = sadd.s32 0, 0
    %p21 = scmp.lt.s32.totalorder %s20, 0
    %s22 = scalar_select %p21, %s20, 0
    %s23 = smul.u32 96, %s22
  $region5: #{ws_forward.1} parent=0 // pred_fallthru
    _
  // Predicated region
  $region6: #{ws_forward.1} parent=0 // pred_check
    _
  $region7: #{ws_forward.1} parent=0 // pred_check_branch
    %25 = sbr.rel (0) target = $region9
  $region8: #{ws_forward.1} parent=0 // pred_region
    %s26 = sadd.s32 0, 0
    %s27 = smul.u32 6, %s26
    %p28 = scmp.lt.s32.totalorder %s27, 5
    %s29 = scalar_select %p28, %s27, 5
    %s30 = scalar_lea.vmem %s1, %s29
    %s31 = sadd.s32 0, 0
    %s32 = smul.u32 6, %s31
  $region9: #{ws_forward.1} parent=0 // pred_fallthru
    _
  // Predicated region
  $region10: #{ws_forward.1} parent=0 // pred_check
    _
  $region11: #{ws_forward.1} parent=0 // pred_check_branch
    %34 = sbr.rel (0) target = $region13
  $region12: #{ws_forward.1} parent=0 // pred_region
    %s35 = sadd.s32 0, 0
    %s36 = smul.u32 6, %s35
    %p37 = scmp.lt.s32.totalorder %s36, 5
    %s38 = scalar_select %p37, %s36, 5
    %s39 = scalar_lea.vmem %s2, %s38
    %s40 = sadd.s32 0, 0
    %s41 = smul.u32 6, %s40
  $region13: #{ws_forward.1} parent=0 // pred_fallthru
    _
  // Predicated region
  $region14: #{ws_forward.1} parent=0 // pred_check
    _
  $region15: #{ws_forward.1} parent=0 // pred_check_branch
    %43 = sbr.rel (0) target = $region17
  $region16: #{ws_forward.1} parent=0 // pred_region
    _
  $region17: #{ws_forward.1} parent=0 // pred_fallthru
    _
  // Predicated region
  $region18: #{ws_forward.1} parent=0 // pred_check
    _
  $region19: #{ws_forward.1} parent=0 // pred_check_branch
    %45 = sbr.rel (0) target = $region21
  $region20: #{ws_forward.1} parent=0 // pred_region
    _
  $region21: #{ws_forward.1} parent=0 // pred_fallthru
    _
  %s46 = sadd.s32 0, 0
  %p47 = scmp.lt.s32.totalorder %s46, 0
  %s48 = scalar_select %p47, %s46, 0
  %s49 = smul.u32 96, %s48
  %p50 = scmp.lt.s32.totalorder %s49, 95
  %s51 = scalar_select %p50, %s49, 95
  %s52 = smul.addr %s51, 8
  %s53 = scalar_lea.vmem %s0, %s52
  %s54 = sadd.s32 0, 0
  %s55 = smul.u32 6, %s54
  %p56 = scmp.lt.s32.totalorder %s55, 5
  %s57 = scalar_select %p56, %s55, 5
  %s58 = scalar_lea.vmem %s1, %s57
  %s59 = sadd.s32 0, 0
  %s60 = smul.u32 6, %s59
  %p61 = scmp.lt.s32.totalorder %s60, 5
  %s62 = scalar_select %p61, %s60, 5
  %s63 = scalar_lea.vmem %s2, %s62
  %s64 = sadd.s32 0, 0
  %p65 = scmp.lt.s32.totalorder %s64, 0
  %s66 = scalar_select %p65, %s64, 0
  %s67 = smul.u32 96, %s66
  %p68 = scmp.lt.s32.totalorder %s67, 95
  %s69 = scalar_select %p68, %s67, 95
  %s70 = smul.addr %s69, 8
  %s71 = scalar_lea.vmem %s0, %s70
  %s72 = sadd.s32 0, 0
  %p73 = scmp.lt.s32.totalorder %s72, 0
  %s74 = scalar_select %p73, %s72, 0
  %s75 = smul.u32 96, %s74
  %s76 = sadd.s32 0, 0
  %s77 = smul.u32 6, %s76
  %p78 = scmp.lt.s32.totalorder %s77, 5
  %s79 = scalar_select %p78, %s77, 5
  %s80 = scalar_lea.vmem %s1, %s79
  %s81 = sadd.s32 0, 0
  %s82 = smul.u32 6, %s81
  %s83 = sadd.s32 0, 0
  %s84 = smul.u32 6, %s83
  %p85 = scmp.lt.s32.totalorder %s84, 5
  %s86 = scalar_select %p85, %s84, 5
  %s87 = scalar_lea.vmem %s2, %s86
  %s88 = sadd.s32 0, 0
  %s89 = smul.u32 6, %s88
  %p91 = scmp.eq.s32.totalorder 0, 0
  // Predicated region
  $region22: #{ws_forward.1} parent=0 // pred_check
    %p92 = pneg %p91
  $region23: #{ws_forward.1} parent=0 // pred_check_branch
    %94 = sbr.rel (%p92) target = $region25
  $region24: #{ws_forward.1} parent=0 // pred_region
    %vm95 = vcmask 261120
    %96 = vst.msk [vmem:[#allocation2] sm:$0xff] %vm95, 0.0
  $region25: #{ws_forward.1} parent=0 // pred_fallthru
    _
  %s97 = sadd.s32 0, 0
  %s98 = smul.u32 %s97, 768
  %s99 = ssub.s32 700, %s98
  %v100 = vld [vmem:[%s80] sm:$0x3f]
  %v101 = vld [vmem:[%s87] sm:$0x3f]
  %v102 = vlaneseq
  %v103 = vshrl.u32 %v102, 7
  %v104 = vlaneseq
  %v105 = vshrl.u32 %v104, 7
  %v106 = vsub.s32 0, %v105
  %v107 = vrot.slane %v100, %v106
  %v108 = vlaneseq
  %v109 = vshrl.u32 %v108, 7
  %v110 = vsub.s32 1, %v109
  %v111 = vrot.slane %v100, %v110
  %v112 = vlaneseq
  %v113 = vshrl.u32 %v112, 7
  %v114 = vsub.s32 2, %v113
  %v115 = vrot.slane %v100, %v114
  %v116 = vlaneseq
  %v117 = vshrl.u32 %v116, 7
  %v118 = vsub.s32 3, %v117
  %v119 = vrot.slane %v100, %v118
  %v120 = vlaneseq
  %v121 = vshrl.u32 %v120, 7
  %v122 = vsub.s32 4, %v121
  %v123 = vrot.slane %v100, %v122
  %v124 = vlaneseq
  %v125 = vshrl.u32 %v124, 7
  %v126 = vsub.s32 5, %v125
  %v127 = vrot.slane %v100, %v126
  %vm128 = vcmp.eq.s32.totalorder %v103, %v107
  %vm129 = vcmp.eq.s32.totalorder %v103, %v111
  %vm130 = vcmp.eq.s32.totalorder %v103, %v115
  %vm131 = vcmp.eq.s32.totalorder %v103, %v119
  %vm132 = vcmp.eq.s32.totalorder %v103, %v123
  %vm133 = vcmp.eq.s32.totalorder %v103, %v127
  %v135 = vlaneseq
  %v136 = vshrl.u32 %v135, 7
  %v137 = vsub.s32 0, %v136
  %v138 = vrot.slane %v101, %v137
  %v139 = vlaneseq
  %v140 = vshrl.u32 %v139, 7
  %v141 = vsub.s32 1, %v140
  %v142 = vrot.slane %v101, %v141
  %v143 = vlaneseq
  %v144 = vshrl.u32 %v143, 7
  %v145 = vsub.s32 2, %v144
  %v146 = vrot.slane %v101, %v145
  %v147 = vlaneseq
  %v148 = vshrl.u32 %v147, 7
  %v149 = vsub.s32 3, %v148
  %v150 = vrot.slane %v101, %v149
  %v151 = vlaneseq
  %v152 = vshrl.u32 %v151, 7
  %v153 = vsub.s32 4, %v152
  %v154 = vrot.slane %v101, %v153
  %v155 = vlaneseq
  %v156 = vshrl.u32 %v155, 7
  %v157 = vsub.s32 5, %v156
  %v158 = vrot.slane %v101, %v157
  %v165 = vsel %vm128, %v138, 0.0
  %v166 = vsel %vm129, %v142, 0.0
  %v167 = vsel %vm130, %v146, 0.0
  %v168 = vsel %vm131, %v150, 0.0
  %v169 = vsel %vm132, %v154, 0.0
  %v170 = vsel %vm133, %v158, 0.0
  %v171 = vpack.c.bf16 %v165, %v165
  %v172 = vpack.c.bf16 %v166, %v166
  %v173 = vpack.c.bf16 %v167, %v167
  %v174 = vpack.c.bf16 %v168, %v168
  %v175 = vpack.c.bf16 %v169, %v169
  %v176 = vpack.c.bf16 %v170, %v170
  %v177 = vld [vmem:[%s71] sm:$0xff]
  %v178 = vld [vmem:[%s71 + $0x8] sm:$0xff]
  %v179 = vld [vmem:[%s71 + $0x10] sm:$0xff]
  %v180 = vld [vmem:[%s71 + $0x18] sm:$0xff]
  %v181 = vld [vmem:[%s71 + $0x20] sm:$0xff]
  %v182 = vld [vmem:[%s71 + $0x28] sm:$0xff]
  %v183 = vld [vmem:[%s71 + $0x30] sm:$0xff]
  %v184 = vld [vmem:[%s71 + $0x38] sm:$0xff]
  %v185 = vld [vmem:[%s71 + $0x40] sm:$0xff]
  %v186 = vld [vmem:[%s71 + $0x48] sm:$0xff]
  %v187 = vld [vmem:[%s71 + $0x50] sm:$0xff]
  %v188 = vld [vmem:[%s71 + $0x58] sm:$0xff]
  %v189 = vld [vmem:[%s71 + $0x60] sm:$0xff]
  %v190 = vld [vmem:[%s71 + $0x68] sm:$0xff]
  %v191 = vld [vmem:[%s71 + $0x70] sm:$0xff]
  %v192 = vld [vmem:[%s71 + $0x78] sm:$0xff]
  %v193 = vld [vmem:[%s71 + $0x80] sm:$0xff]
  %v194 = vld [vmem:[%s71 + $0x88] sm:$0xff]
  %v195 = vld [vmem:[%s71 + $0x90] sm:$0xff]
  %v196 = vld [vmem:[%s71 + $0x98] sm:$0xff]
  %v197 = vld [vmem:[%s71 + $0xa0] sm:$0xff]
  %v198 = vld [vmem:[%s71 + $0xa8] sm:$0xff]
  %v199 = vld [vmem:[%s71 + $0xb0] sm:$0xff]
  %v200 = vld [vmem:[%s71 + $0xb8] sm:$0xff]
  %v201 = vld [vmem:[%s71 + $0xc0] sm:$0xff]
  %v202 = vld [vmem:[%s71 + $0xc8] sm:$0xff]
  %v203 = vld [vmem:[%s71 + $0xd0] sm:$0xff]
  %v204 = vld [vmem:[%s71 + $0xd8] sm:$0xff]
  %v205 = vld [vmem:[%s71 + $0xe0] sm:$0xff]
  %v206 = vld [vmem:[%s71 + $0xe8] sm:$0xff]
  %v207 = vld [vmem:[%s71 + $0xf0] sm:$0xff]
  %v208 = vld [vmem:[%s71 + $0xf8] sm:$0xff]
  %v209 = vld [vmem:[%s71 + $0x100] sm:$0xff]
  %v210 = vld [vmem:[%s71 + $0x108] sm:$0xff]
  %v211 = vld [vmem:[%s71 + $0x110] sm:$0xff]
  %v212 = vld [vmem:[%s71 + $0x118] sm:$0xff]
  %v213 = vld [vmem:[%s71 + $0x120] sm:$0xff]
  %v214 = vld [vmem:[%s71 + $0x128] sm:$0xff]
  %v215 = vld [vmem:[%s71 + $0x130] sm:$0xff]
  %v216 = vld [vmem:[%s71 + $0x138] sm:$0xff]
  %v217 = vld [vmem:[%s71 + $0x140] sm:$0xff]
  %v218 = vld [vmem:[%s71 + $0x148] sm:$0xff]
  %v219 = vld [vmem:[%s71 + $0x150] sm:$0xff]
  %v220 = vld [vmem:[%s71 + $0x158] sm:$0xff]
  %v221 = vld [vmem:[%s71 + $0x160] sm:$0xff]
  %v222 = vld [vmem:[%s71 + $0x168] sm:$0xff]
  %v223 = vld [vmem:[%s71 + $0x170] sm:$0xff]
  %v224 = vld [vmem:[%s71 + $0x178] sm:$0xff]
  %v225 = vld [vmem:[%s71 + $0x180] sm:$0xff]
  %v226 = vld [vmem:[%s71 + $0x188] sm:$0xff]
  %v227 = vld [vmem:[%s71 + $0x190] sm:$0xff]
  %v228 = vld [vmem:[%s71 + $0x198] sm:$0xff]
  %v229 = vld [vmem:[%s71 + $0x1a0] sm:$0xff]
  %v230 = vld [vmem:[%s71 + $0x1a8] sm:$0xff]
  %v231 = vld [vmem:[%s71 + $0x1b0] sm:$0xff]
  %v232 = vld [vmem:[%s71 + $0x1b8] sm:$0xff]
  %v233 = vld [vmem:[%s71 + $0x1c0] sm:$0xff]
  %v234 = vld [vmem:[%s71 + $0x1c8] sm:$0xff]
  %v235 = vld [vmem:[%s71 + $0x1d0] sm:$0xff]
  %v236 = vld [vmem:[%s71 + $0x1d8] sm:$0xff]
  %v237 = vld [vmem:[%s71 + $0x1e0] sm:$0xff]
  %v238 = vld [vmem:[%s71 + $0x1e8] sm:$0xff]
  %v239 = vld [vmem:[%s71 + $0x1f0] sm:$0xff]
  %v240 = vld [vmem:[%s71 + $0x1f8] sm:$0xff]
  %v241 = vld [vmem:[%s71 + $0x200] sm:$0xff]
  %v242 = vld [vmem:[%s71 + $0x208] sm:$0xff]
  %v243 = vld [vmem:[%s71 + $0x210] sm:$0xff]
  %v244 = vld [vmem:[%s71 + $0x218] sm:$0xff]
  %v245 = vld [vmem:[%s71 + $0x220] sm:$0xff]
  %v246 = vld [vmem:[%s71 + $0x228] sm:$0xff]
  %v247 = vld [vmem:[%s71 + $0x230] sm:$0xff]
  %v248 = vld [vmem:[%s71 + $0x238] sm:$0xff]
  %v249 = vld [vmem:[%s71 + $0x240] sm:$0xff]
  %v250 = vld [vmem:[%s71 + $0x248] sm:$0xff]
  %v251 = vld [vmem:[%s71 + $0x250] sm:$0xff]
  %v252 = vld [vmem:[%s71 + $0x258] sm:$0xff]
  %v253 = vld [vmem:[%s71 + $0x260] sm:$0xff]
  %v254 = vld [vmem:[%s71 + $0x268] sm:$0xff]
  %v255 = vld [vmem:[%s71 + $0x270] sm:$0xff]
  %v256 = vld [vmem:[%s71 + $0x278] sm:$0xff]
  %v257 = vld [vmem:[%s71 + $0x280] sm:$0xff]
  %v258 = vld [vmem:[%s71 + $0x288] sm:$0xff]
  %v259 = vld [vmem:[%s71 + $0x290] sm:$0xff]
  %v260 = vld [vmem:[%s71 + $0x298] sm:$0xff]
  %v261 = vld [vmem:[%s71 + $0x2a0] sm:$0xff]
  %v262 = vld [vmem:[%s71 + $0x2a8] sm:$0xff]
  %v263 = vld [vmem:[%s71 + $0x2b0] sm:$0xff]
  %v264 = vld [vmem:[%s71 + $0x2b8] sm:$0xff]
  %v265 = vld [vmem:[%s71 + $0x2c0] sm:$0xff]
  %v266 = vld [vmem:[%s71 + $0x2c8] sm:$0xff]
  %v267 = vld [vmem:[%s71 + $0x2d0] sm:$0xff]
  %v268 = vld [vmem:[%s71 + $0x2d8] sm:$0xff]
  %v269 = vld [vmem:[%s71 + $0x2e0] sm:$0xff]
  %v270 = vld [vmem:[%s71 + $0x2e8] sm:$0xff]
  %v271 = vld [vmem:[%s71 + $0x2f0] sm:$0xff]
  %v272 = vld [vmem:[%s71 + $0x2f8] sm:$0xff]
  %v273 = vadd.s32 %v103, 8
  %v274 = vadd.s32 %v103, 16
  %v275 = vadd.s32 %v103, 24
  %v276 = vadd.s32 %v103, 32
  %v277 = vadd.s32 %v103, 40
  %v278 = vadd.s32 %v103, 48
  %v279 = vadd.s32 %v103, 56
  %v280 = vadd.s32 %v103, 64
  %v281 = vadd.s32 %v103, 72
  %v282 = vadd.s32 %v103, 80
  %v283 = vadd.s32 %v103, 88
  %v284 = vadd.s32 %v103, 96
  %v285 = vadd.s32 %v103, 104
  %v286 = vadd.s32 %v103, 112
  %v287 = vadd.s32 %v103, 120
  %v288 = vadd.s32 %v103, 128
  %v289 = vadd.s32 %v103, 136
  %v290 = vadd.s32 %v103, 144
  %v291 = vadd.s32 %v103, 152
  %v292 = vadd.s32 %v103, 160
  %v293 = vadd.s32 %v103, 168
  %v294 = vadd.s32 %v103, 176
  %v295 = vadd.s32 %v103, 184
  %v296 = vadd.s32 %v103, 192
  %v297 = vadd.s32 %v103, 200
  %v298 = vadd.s32 %v103, 208
  %v299 = vadd.s32 %v103, 216
  %v300 = vadd.s32 %v103, 224
  %v301 = vadd.s32 %v103, 232
  %v302 = vadd.s32 %v103, 240
  %v303 = vadd.s32 %v103, 248
  %v304 = vadd.s32 %v103, 256
  %v305 = vadd.s32 %v103, 264
  %v306 = vadd.s32 %v103, 272
  %v307 = vadd.s32 %v103, 280
  %v308 = vadd.s32 %v103, 288
  %v309 = vadd.s32 %v103, 296
  %v310 = vadd.s32 %v103, 304
  %v311 = vadd.s32 %v103, 312
  %v312 = vadd.s32 %v103, 320
  %v313 = vadd.s32 %v103, 328
  %v314 = vadd.s32 %v103, 336
  %v315 = vadd.s32 %v103, 344
  %v316 = vadd.s32 %v103, 352
  %v317 = vadd.s32 %v103, 360
  %v318 = vadd.s32 %v103, 368
  %v319 = vadd.s32 %v103, 376
  %v320 = vadd.s32 %v103, 384
  %v321 = vadd.s32 %v103, 392
  %v322 = vadd.s32 %v103, 400
  %v323 = vadd.s32 %v103, 408
  %v324 = vadd.s32 %v103, 416
  %v325 = vadd.s32 %v103, 424
  %v326 = vadd.s32 %v103, 432
  %v327 = vadd.s32 %v103, 440
  %v328 = vadd.s32 %v103, 448
  %v329 = vadd.s32 %v103, 456
  %v330 = vadd.s32 %v103, 464
  %v331 = vadd.s32 %v103, 472
  %v332 = vadd.s32 %v103, 480
  %v333 = vadd.s32 %v103, 488
  %v334 = vadd.s32 %v103, 496
  %v335 = vadd.s32 %v103, 504
  %v336 = vadd.s32 %v103, 512
  %v337 = vadd.s32 %v103, 520
  %v338 = vadd.s32 %v103, 528
  %v339 = vadd.s32 %v103, 536
  %v340 = vadd.s32 %v103, 544
  %v341 = vadd.s32 %v103, 552
  %v342 = vadd.s32 %v103, 560
  %v343 = vadd.s32 %v103, 568
  %v344 = vadd.s32 %v103, 576
  %v345 = vadd.s32 %v103, 584
  %v346 = vadd.s32 %v103, 592
  %v347 = vadd.s32 %v103, 600
  %v348 = vadd.s32 %v103, 608
  %v349 = vadd.s32 %v103, 616
  %v350 = vadd.s32 %v103, 624
  %v351 = vadd.s32 %v103, 632
  %v352 = vadd.s32 %v103, 640
  %v353 = vadd.s32 %v103, 648
  %v354 = vadd.s32 %v103, 656
  %v355 = vadd.s32 %v103, 664
  %v356 = vadd.s32 %v103, 672
  %v357 = vadd.s32 %v103, 680
  %v358 = vadd.s32 %v103, 688
  %v359 = vadd.s32 %v103, 696
  %v360 = vadd.s32 %v103, 704
  %v361 = vadd.s32 %v103, 712
  %v362 = vadd.s32 %v103, 720
  %v363 = vadd.s32 %v103, 728
  %v364 = vadd.s32 %v103, 736
  %v365 = vadd.s32 %v103, 744
  %v366 = vadd.s32 %v103, 752
  %v367 = vadd.s32 %v103, 760
  %v368 = vstv %s99
  %vm369 = vcmp.lt.s32.totalorder %v103, %v368
  %vm370 = vcmp.lt.s32.totalorder %v273, %v368
  %vm371 = vcmp.lt.s32.totalorder %v274, %v368
  %vm372 = vcmp.lt.s32.totalorder %v275, %v368
  %vm373 = vcmp.lt.s32.totalorder %v276, %v368
  %vm374 = vcmp.lt.s32.totalorder %v277, %v368
  %vm375 = vcmp.lt.s32.totalorder %v278, %v368
  %vm376 = vcmp.lt.s32.totalorder %v279, %v368
  %vm377 = vcmp.lt.s32.totalorder %v280, %v368
  %vm378 = vcmp.lt.s32.totalorder %v281, %v368
  %vm379 = vcmp.lt.s32.totalorder %v282, %v368
  %vm380 = vcmp.lt.s32.totalorder %v283, %v368
  %vm381 = vcmp.lt.s32.totalorder %v284, %v368
  %vm382 = vcmp.lt.s32.totalorder %v285, %v368
  %vm383 = vcmp.lt.s32.totalorder %v286, %v368
  %vm384 = vcmp.lt.s32.totalorder %v287, %v368
  %vm385 = vcmp.lt.s32.totalorder %v288, %v368
  %vm386 = vcmp.lt.s32.totalorder %v289, %v368
  %vm387 = vcmp.lt.s32.totalorder %v290, %v368
  %vm388 = vcmp.lt.s32.totalorder %v291, %v368
  %vm389 = vcmp.lt.s32.totalorder %v292, %v368
  %vm390 = vcmp.lt.s32.totalorder %v293, %v368
  %vm391 = vcmp.lt.s32.totalorder %v294, %v368
  %vm392 = vcmp.lt.s32.totalorder %v295, %v368
  %vm393 = vcmp.lt.s32.totalorder %v296, %v368
  %vm394 = vcmp.lt.s32.totalorder %v297, %v368
  %vm395 = vcmp.lt.s32.totalorder %v298, %v368
  %vm396 = vcmp.lt.s32.totalorder %v299, %v368
  %vm397 = vcmp.lt.s32.totalorder %v300, %v368
  %vm398 = vcmp.lt.s32.totalorder %v301, %v368
  %vm399 = vcmp.lt.s32.totalorder %v302, %v368
  %vm400 = vcmp.lt.s32.totalorder %v303, %v368
  %vm401 = vcmp.lt.s32.totalorder %v304, %v368
  %vm402 = vcmp.lt.s32.totalorder %v305, %v368
  %vm403 = vcmp.lt.s32.totalorder %v306, %v368
  %vm404 = vcmp.lt.s32.totalorder %v307, %v368
  %vm405 = vcmp.lt.s32.totalorder %v308, %v368
  %vm406 = vcmp.lt.s32.totalorder %v309, %v368
  %vm407 = vcmp.lt.s32.totalorder %v310, %v368
  %vm408 = vcmp.lt.s32.totalorder %v311, %v368
  %vm409 = vcmp.lt.s32.totalorder %v312, %v368
  %vm410 = vcmp.lt.s32.totalorder %v313, %v368
  %vm411 = vcmp.lt.s32.totalorder %v314, %v368
  %vm412 = vcmp.lt.s32.totalorder %v315, %v368
  %vm413 = vcmp.lt.s32.totalorder %v316, %v368
  %vm414 = vcmp.lt.s32.totalorder %v317, %v368
  %vm415 = vcmp.lt.s32.totalorder %v318, %v368
  %vm416 = vcmp.lt.s32.totalorder %v319, %v368
  %vm417 = vcmp.lt.s32.totalorder %v320, %v368
  %vm418 = vcmp.lt.s32.totalorder %v321, %v368
  %vm419 = vcmp.lt.s32.totalorder %v322, %v368
  %vm420 = vcmp.lt.s32.totalorder %v323, %v368
  %vm421 = vcmp.lt.s32.totalorder %v324, %v368
  %vm422 = vcmp.lt.s32.totalorder %v325, %v368
  %vm423 = vcmp.lt.s32.totalorder %v326, %v368
  %vm424 = vcmp.lt.s32.totalorder %v327, %v368
  %vm425 = vcmp.lt.s32.totalorder %v328, %v368
  %vm426 = vcmp.lt.s32.totalorder %v329, %v368
  %vm427 = vcmp.lt.s32.totalorder %v330, %v368
  %vm428 = vcmp.lt.s32.totalorder %v331, %v368
  %vm429 = vcmp.lt.s32.totalorder %v332, %v368
  %vm430 = vcmp.lt.s32.totalorder %v333, %v368
  %vm431 = vcmp.lt.s32.totalorder %v334, %v368
  %vm432 = vcmp.lt.s32.totalorder %v335, %v368
  %vm433 = vcmp.lt.s32.totalorder %v336, %v368
  %vm434 = vcmp.lt.s32.totalorder %v337, %v368
  %vm435 = vcmp.lt.s32.totalorder %v338, %v368
  %vm436 = vcmp.lt.s32.totalorder %v339, %v368
  %vm437 = vcmp.lt.s32.totalorder %v340, %v368
  %vm438 = vcmp.lt.s32.totalorder %v341, %v368
  %vm439 = vcmp.lt.s32.totalorder %v342, %v368
  %vm440 = vcmp.lt.s32.totalorder %v343, %v368
  %vm441 = vcmp.lt.s32.totalorder %v344, %v368
  %vm442 = vcmp.lt.s32.totalorder %v345, %v368
  %vm443 = vcmp.lt.s32.totalorder %v346, %v368
  %vm444 = vcmp.lt.s32.totalorder %v347, %v368
  %vm445 = vcmp.lt.s32.totalorder %v348, %v368
  %vm446 = vcmp.lt.s32.totalorder %v349, %v368
  %vm447 = vcmp.lt.s32.totalorder %v350, %v368
  %vm448 = vcmp.lt.s32.totalorder %v351, %v368
  %vm449 = vcmp.lt.s32.totalorder %v352, %v368
  %vm450 = vcmp.lt.s32.totalorder %v353, %v368
  %vm451 = vcmp.lt.s32.totalorder %v354, %v368
  %vm452 = vcmp.lt.s32.totalorder %v355, %v368
  %vm453 = vcmp.lt.s32.totalorder %v356, %v368
  %vm454 = vcmp.lt.s32.totalorder %v357, %v368
  %vm455 = vcmp.lt.s32.totalorder %v358, %v368
  %vm456 = vcmp.lt.s32.totalorder %v359, %v368
  %vm457 = vcmp.lt.s32.totalorder %v360, %v368
  %vm458 = vcmp.lt.s32.totalorder %v361, %v368
  %vm459 = vcmp.lt.s32.totalorder %v362, %v368
  %vm460 = vcmp.lt.s32.totalorder %v363, %v368
  %vm461 = vcmp.lt.s32.totalorder %v364, %v368
  %vm462 = vcmp.lt.s32.totalorder %v365, %v368
  %vm463 = vcmp.lt.s32.totalorder %v366, %v368
  %vm464 = vcmp.lt.s32.totalorder %v367, %v368
  %v465 = vsel %vm369, 1, 0
  %v466 = vsel %vm370, 1, 0
  %v467 = vsel %vm371, 1, 0
  %v468 = vsel %vm372, 1, 0
  %v469 = vsel %vm373, 1, 0
  %v470 = vsel %vm374, 1, 0
  %v471 = vsel %vm375, 1, 0
  %v472 = vsel %vm376, 1, 0
  %v473 = vsel %vm377, 1, 0
  %v474 = vsel %vm378, 1, 0
  %v475 = vsel %vm379, 1, 0
  %v476 = vsel %vm380, 1, 0
  %v477 = vsel %vm381, 1, 0
  %v478 = vsel %vm382, 1, 0
  %v479 = vsel %vm383, 1, 0
  %v480 = vsel %vm384, 1, 0
  %v481 = vsel %vm385, 1, 0
  %v482 = vsel %vm386, 1, 0
  %v483 = vsel %vm387, 1, 0
  %v484 = vsel %vm388, 1, 0
  %v485 = vsel %vm389, 1, 0
  %v486 = vsel %vm390, 1, 0
  %v487 = vsel %vm391, 1, 0
  %v488 = vsel %vm392, 1, 0
  %v489 = vsel %vm393, 1, 0
  %v490 = vsel %vm394, 1, 0
  %v491 = vsel %vm395, 1, 0
  %v492 = vsel %vm396, 1, 0
  %v493 = vsel %vm397, 1, 0
  %v494 = vsel %vm398, 1, 0
  %v495 = vsel %vm399, 1, 0
  %v496 = vsel %vm400, 1, 0
  %v497 = vsel %vm401, 1, 0
  %v498 = vsel %vm402, 1, 0
  %v499 = vsel %vm403, 1, 0
  %v500 = vsel %vm404, 1, 0
  %v501 = vsel %vm405, 1, 0
  %v502 = vsel %vm406, 1, 0
  %v503 = vsel %vm407, 1, 0
  %v504 = vsel %vm408, 1, 0
  %v505 = vsel %vm409, 1, 0
  %v506 = vsel %vm410, 1, 0
  %v507 = vsel %vm411, 1, 0
  %v508 = vsel %vm412, 1, 0
  %v509 = vsel %vm413, 1, 0
  %v510 = vsel %vm414, 1, 0
  %v511 = vsel %vm415, 1, 0
  %v512 = vsel %vm416, 1, 0
  %v513 = vsel %vm417, 1, 0
  %v514 = vsel %vm418, 1, 0
  %v515 = vsel %vm419, 1, 0
  %v516 = vsel %vm420, 1, 0
  %v517 = vsel %vm421, 1, 0
  %v518 = vsel %vm422, 1, 0
  %v519 = vsel %vm423, 1, 0
  %v520 = vsel %vm424, 1, 0
  %v521 = vsel %vm425, 1, 0
  %v522 = vsel %vm426, 1, 0
  %v523 = vsel %vm427, 1, 0
  %v524 = vsel %vm428, 1, 0
  %v525 = vsel %vm429, 1, 0
  %v526 = vsel %vm430, 1, 0
  %v527 = vsel %vm431, 1, 0
  %v528 = vsel %vm432, 1, 0
  %v529 = vsel %vm433, 1, 0
  %v530 = vsel %vm434, 1, 0
  %v531 = vsel %vm435, 1, 0
  %v532 = vsel %vm436, 1, 0
  %v533 = vsel %vm437, 1, 0
  %v534 = vsel %vm438, 1, 0
  %v535 = vsel %vm439, 1, 0
  %v536 = vsel %vm440, 1, 0
  %v537 = vsel %vm441, 1, 0
  %v538 = vsel %vm442, 1, 0
  %v539 = vsel %vm443, 1, 0
  %v540 = vsel %vm444, 1, 0
  %v541 = vsel %vm445, 1, 0
  %v542 = vsel %vm446, 1, 0
  %v543 = vsel %vm447, 1, 0
  %v544 = vsel %vm448, 1, 0
  %v545 = vsel %vm449, 1, 0
  %v546 = vsel %vm450, 1, 0
  %v547 = vsel %vm451, 1, 0
  %v548 = vsel %vm452, 1, 0
  %v549 = vsel %vm453, 1, 0
  %v550 = vsel %vm454, 1, 0
  %v551 = vsel %vm455, 1, 0
  %v552 = vsel %vm456, 1, 0
  %v553 = vsel %vm457, 1, 0
  %v554 = vsel %vm458, 1, 0
  %v555 = vsel %vm459, 1, 0
  %v556 = vsel %vm460, 1, 0
  %v557 = vsel %vm461, 1, 0
  %v558 = vsel %vm462, 1, 0
  %v559 = vsel %vm463, 1, 0
  %v560 = vsel %vm464, 1, 0
  %vm561 = vcmp.eq.s32.totalorder %v465, 1
  %vm562 = vcmp.eq.s32.totalorder %v466, 1
  %vm563 = vcmp.eq.s32.totalorder %v467, 1
  %vm564 = vcmp.eq.s32.totalorder %v468, 1
  %vm565 = vcmp.eq.s32.totalorder %v469, 1
  %vm566 = vcmp.eq.s32.totalorder %v470, 1
  %vm567 = vcmp.eq.s32.totalorder %v471, 1
  %vm568 = vcmp.eq.s32.totalorder %v472, 1
  %vm569 = vcmp.eq.s32.totalorder %v473, 1
  %vm570 = vcmp.eq.s32.totalorder %v474, 1
  %vm571 = vcmp.eq.s32.totalorder %v475, 1
  %vm572 = vcmp.eq.s32.totalorder %v476, 1
  %vm573 = vcmp.eq.s32.totalorder %v477, 1
  %vm574 = vcmp.eq.s32.totalorder %v478, 1
  %vm575 = vcmp.eq.s32.totalorder %v479, 1
  %vm576 = vcmp.eq.s32.totalorder %v480, 1
  %vm577 = vcmp.eq.s32.totalorder %v481, 1
  %vm578 = vcmp.eq.s32.totalorder %v482, 1
  %vm579 = vcmp.eq.s32.totalorder %v483, 1
  %vm580 = vcmp.eq.s32.totalorder %v484, 1
  %vm581 = vcmp.eq.s32.totalorder %v485, 1
  %vm582 = vcmp.eq.s32.totalorder %v486, 1
  %vm583 = vcmp.eq.s32.totalorder %v487, 1
  %vm584 = vcmp.eq.s32.totalorder %v488, 1
  %vm585 = vcmp.eq.s32.totalorder %v489, 1
  %vm586 = vcmp.eq.s32.totalorder %v490, 1
  %vm587 = vcmp.eq.s32.totalorder %v491, 1
  %vm588 = vcmp.eq.s32.totalorder %v492, 1
  %vm589 = vcmp.eq.s32.totalorder %v493, 1
  %vm590 = vcmp.eq.s32.totalorder %v494, 1
  %vm591 = vcmp.eq.s32.totalorder %v495, 1
  %vm592 = vcmp.eq.s32.totalorder %v496, 1
  %vm593 = vcmp.eq.s32.totalorder %v497, 1
  %vm594 = vcmp.eq.s32.totalorder %v498, 1
  %vm595 = vcmp.eq.s32.totalorder %v499, 1
  %vm596 = vcmp.eq.s32.totalorder %v500, 1
  %vm597 = vcmp.eq.s32.totalorder %v501, 1
  %vm598 = vcmp.eq.s32.totalorder %v502, 1
  %vm599 = vcmp.eq.s32.totalorder %v503, 1
  %vm600 = vcmp.eq.s32.totalorder %v504, 1
  %vm601 = vcmp.eq.s32.totalorder %v505, 1
  %vm602 = vcmp.eq.s32.totalorder %v506, 1
  %vm603 = vcmp.eq.s32.totalorder %v507, 1
  %vm604 = vcmp.eq.s32.totalorder %v508, 1
  %vm605 = vcmp.eq.s32.totalorder %v509, 1
  %vm606 = vcmp.eq.s32.totalorder %v510, 1
  %vm607 = vcmp.eq.s32.totalorder %v511, 1
  %vm608 = vcmp.eq.s32.totalorder %v512, 1
  %vm609 = vcmp.eq.s32.totalorder %v513, 1
  %vm610 = vcmp.eq.s32.totalorder %v514, 1
  %vm611 = vcmp.eq.s32.totalorder %v515, 1
  %vm612 = vcmp.eq.s32.totalorder %v516, 1
  %vm613 = vcmp.eq.s32.totalorder %v517, 1
  %vm614 = vcmp.eq.s32.totalorder %v518, 1
  %vm615 = vcmp.eq.s32.totalorder %v519, 1
  %vm616 = vcmp.eq.s32.totalorder %v520, 1
  %vm617 = vcmp.eq.s32.totalorder %v521, 1
  %vm618 = vcmp.eq.s32.totalorder %v522, 1
  %vm619 = vcmp.eq.s32.totalorder %v523, 1
  %vm620 = vcmp.eq.s32.totalorder %v524, 1
  %vm621 = vcmp.eq.s32.totalorder %v525, 1
  %vm622 = vcmp.eq.s32.totalorder %v526, 1
  %vm623 = vcmp.eq.s32.totalorder %v527, 1
  %vm624 = vcmp.eq.s32.totalorder %v528, 1
  %vm625 = vcmp.eq.s32.totalorder %v529, 1
  %vm626 = vcmp.eq.s32.totalorder %v530, 1
  %vm627 = vcmp.eq.s32.totalorder %v531, 1
  %vm628 = vcmp.eq.s32.totalorder %v532, 1
  %vm629 = vcmp.eq.s32.totalorder %v533, 1
  %vm630 = vcmp.eq.s32.totalorder %v534, 1
  %vm631 = vcmp.eq.s32.totalorder %v535, 1
  %vm632 = vcmp.eq.s32.totalorder %v536, 1
  %vm633 = vcmp.eq.s32.totalorder %v537, 1
  %vm634 = vcmp.eq.s32.totalorder %v538, 1
  %vm635 = vcmp.eq.s32.totalorder %v539, 1
  %vm636 = vcmp.eq.s32.totalorder %v540, 1
  %vm637 = vcmp.eq.s32.totalorder %v541, 1
  %vm638 = vcmp.eq.s32.totalorder %v542, 1
  %vm639 = vcmp.eq.s32.totalorder %v543, 1
  %vm640 = vcmp.eq.s32.totalorder %v544, 1
  %vm641 = vcmp.eq.s32.totalorder %v545, 1
  %vm642 = vcmp.eq.s32.totalorder %v546, 1
  %vm643 = vcmp.eq.s32.totalorder %v547, 1
  %vm644 = vcmp.eq.s32.totalorder %v548, 1
  %vm645 = vcmp.eq.s32.totalorder %v549, 1
  %vm646 = vcmp.eq.s32.totalorder %v550, 1
  %vm647 = vcmp.eq.s32.totalorder %v551, 1
  %vm648 = vcmp.eq.s32.totalorder %v552, 1
  %vm649 = vcmp.eq.s32.totalorder %v553, 1
  %vm650 = vcmp.eq.s32.totalorder %v554, 1
  %vm651 = vcmp.eq.s32.totalorder %v555, 1
  %vm652 = vcmp.eq.s32.totalorder %v556, 1
  %vm653 = vcmp.eq.s32.totalorder %v557, 1
  %vm654 = vcmp.eq.s32.totalorder %v558, 1
  %vm655 = vcmp.eq.s32.totalorder %v559, 1
  %vm656 = vcmp.eq.s32.totalorder %v560, 1
  %v657 = vsel %vm561, %v177, 0.0
  %v658 = vsel %vm562, %v178, 0.0
  %v659 = vsel %vm563, %v179, 0.0
  %v660 = vsel %vm564, %v180, 0.0
  %v661 = vsel %vm565, %v181, 0.0
  %v662 = vsel %vm566, %v182, 0.0
  %v663 = vsel %vm567, %v183, 0.0
  %v664 = vsel %vm568, %v184, 0.0
  %v665 = vsel %vm569, %v185, 0.0
  %v666 = vsel %vm570, %v186, 0.0
  %v667 = vsel %vm571, %v187, 0.0
  %v668 = vsel %vm572, %v188, 0.0
  %v669 = vsel %vm573, %v189, 0.0
  %v670 = vsel %vm574, %v190, 0.0
  %v671 = vsel %vm575, %v191, 0.0
  %v672 = vsel %vm576, %v192, 0.0
  %v673 = vsel %vm577, %v193, 0.0
  %v674 = vsel %vm578, %v194, 0.0
  %v675 = vsel %vm579, %v195, 0.0
  %v676 = vsel %vm580, %v196, 0.0
  %v677 = vsel %vm581, %v197, 0.0
  %v678 = vsel %vm582, %v198, 0.0
  %v679 = vsel %vm583, %v199, 0.0
  %v680 = vsel %vm584, %v200, 0.0
  %v681 = vsel %vm585, %v201, 0.0
  %v682 = vsel %vm586, %v202, 0.0
  %v683 = vsel %vm587, %v203, 0.0
  %v684 = vsel %vm588, %v204, 0.0
  %v685 = vsel %vm589, %v205, 0.0
  %v686 = vsel %vm590, %v206, 0.0
  %v687 = vsel %vm591, %v207, 0.0
  %v688 = vsel %vm592, %v208, 0.0
  %v689 = vsel %vm593, %v209, 0.0
  %v690 = vsel %vm594, %v210, 0.0
  %v691 = vsel %vm595, %v211, 0.0
  %v692 = vsel %vm596, %v212, 0.0
  %v693 = vsel %vm597, %v213, 0.0
  %v694 = vsel %vm598, %v214, 0.0
  %v695 = vsel %vm599, %v215, 0.0
  %v696 = vsel %vm600, %v216, 0.0
  %v697 = vsel %vm601, %v217, 0.0
  %v698 = vsel %vm602, %v218, 0.0
  %v699 = vsel %vm603, %v219, 0.0
  %v700 = vsel %vm604, %v220, 0.0
  %v701 = vsel %vm605, %v221, 0.0
  %v702 = vsel %vm606, %v222, 0.0
  %v703 = vsel %vm607, %v223, 0.0
  %v704 = vsel %vm608, %v224, 0.0
  %v705 = vsel %vm609, %v225, 0.0
  %v706 = vsel %vm610, %v226, 0.0
  %v707 = vsel %vm611, %v227, 0.0
  %v708 = vsel %vm612, %v228, 0.0
  %v709 = vsel %vm613, %v229, 0.0
  %v710 = vsel %vm614, %v230, 0.0
  %v711 = vsel %vm615, %v231, 0.0
  %v712 = vsel %vm616, %v232, 0.0
  %v713 = vsel %vm617, %v233, 0.0
  %v714 = vsel %vm618, %v234, 0.0
  %v715 = vsel %vm619, %v235, 0.0
  %v716 = vsel %vm620, %v236, 0.0
  %v717 = vsel %vm621, %v237, 0.0
  %v718 = vsel %vm622, %v238, 0.0
  %v719 = vsel %vm623, %v239, 0.0
  %v720 = vsel %vm624, %v240, 0.0
  %v721 = vsel %vm625, %v241, 0.0
  %v722 = vsel %vm626, %v242, 0.0
  %v723 = vsel %vm627, %v243, 0.0
  %v724 = vsel %vm628, %v244, 0.0
  %v725 = vsel %vm629, %v245, 0.0
  %v726 = vsel %vm630, %v246, 0.0
  %v727 = vsel %vm631, %v247, 0.0
  %v728 = vsel %vm632, %v248, 0.0
  %v729 = vsel %vm633, %v249, 0.0
  %v730 = vsel %vm634, %v250, 0.0
  %v731 = vsel %vm635, %v251, 0.0
  %v732 = vsel %vm636, %v252, 0.0
  %v733 = vsel %vm637, %v253, 0.0
  %v734 = vsel %vm638, %v254, 0.0
  %v735 = vsel %vm639, %v255, 0.0
  %v736 = vsel %vm640, %v256, 0.0
  %v737 = vsel %vm641, %v257, 0.0
  %v738 = vsel %vm642, %v258, 0.0
  %v739 = vsel %vm643, %v259, 0.0
  %v740 = vsel %vm644, %v260, 0.0
  %v741 = vsel %vm645, %v261, 0.0
  %v742 = vsel %vm646, %v262, 0.0
  %v743 = vsel %vm647, %v263, 0.0
  %v744 = vsel %vm648, %v264, 0.0
  %v745 = vsel %vm649, %v265, 0.0
  %v746 = vsel %vm650, %v266, 0.0
  %v747 = vsel %vm651, %v267, 0.0
  %v748 = vsel %vm652, %v268, 0.0
  %v749 = vsel %vm653, %v269, 0.0
  %v750 = vsel %vm654, %v270, 0.0
  %v751 = vsel %vm655, %v271, 0.0
  %v752 = vsel %vm656, %v272, 0.0
  %v753 = vpack.c.bf16 %v658, %v657
  %v754 = vpack.c.bf16 %v660, %v659
  %v755 = vpack.c.bf16 %v662, %v661
  %v756 = vpack.c.bf16 %v664, %v663
  %v757 = vpack.c.bf16 %v666, %v665
  %v758 = vpack.c.bf16 %v668, %v667
  %v759 = vpack.c.bf16 %v670, %v669
  %v760 = vpack.c.bf16 %v672, %v671
  %v761 = vpack.c.bf16 %v674, %v673
  %v762 = vpack.c.bf16 %v676, %v675
  %v763 = vpack.c.bf16 %v678, %v677
  %v764 = vpack.c.bf16 %v680, %v679
  %v765 = vpack.c.bf16 %v682, %v681
  %v766 = vpack.c.bf16 %v684, %v683
  %v767 = vpack.c.bf16 %v686, %v685
  %v768 = vpack.c.bf16 %v688, %v687
  %v769 = vpack.c.bf16 %v690, %v689
  %v770 = vpack.c.bf16 %v692, %v691
  %v771 = vpack.c.bf16 %v694, %v693
  %v772 = vpack.c.bf16 %v696, %v695
  %v773 = vpack.c.bf16 %v698, %v697
  %v774 = vpack.c.bf16 %v700, %v699
  %v775 = vpack.c.bf16 %v702, %v701
  %v776 = vpack.c.bf16 %v704, %v703
  %v777 = vpack.c.bf16 %v706, %v705
  %v778 = vpack.c.bf16 %v708, %v707
  %v779 = vpack.c.bf16 %v710, %v709
  %v780 = vpack.c.bf16 %v712, %v711
  %v781 = vpack.c.bf16 %v714, %v713
  %v782 = vpack.c.bf16 %v716, %v715
  %v783 = vpack.c.bf16 %v718, %v717
  %v784 = vpack.c.bf16 %v720, %v719
  %v785 = vpack.c.bf16 %v722, %v721
  %v786 = vpack.c.bf16 %v724, %v723
  %v787 = vpack.c.bf16 %v726, %v725
  %v788 = vpack.c.bf16 %v728, %v727
  %v789 = vpack.c.bf16 %v730, %v729
  %v790 = vpack.c.bf16 %v732, %v731
  %v791 = vpack.c.bf16 %v734, %v733
  %v792 = vpack.c.bf16 %v736, %v735
  %v793 = vpack.c.bf16 %v738, %v737
  %v794 = vpack.c.bf16 %v740, %v739
  %v795 = vpack.c.bf16 %v742, %v741
  %v796 = vpack.c.bf16 %v744, %v743
  %v797 = vpack.c.bf16 %v746, %v745
  %v798 = vpack.c.bf16 %v748, %v747
  %v799 = vpack.c.bf16 %v750, %v749
  %v800 = vpack.c.bf16 %v752, %v751
  %v801 = vld [vmem:[#allocation2] sm:$0xff]
  %802 = vmatprep.subr.bf16.mxu0 0
  %803 = vmatpush1.bf16.msra.mxu0 %v753
  %804 = vmatprep.subr.bf16.mxu0 0
  %805 = vmatpush1.bf16.msra.mxu0 %v754
  %806 = vmatprep.subr.bf16.mxu0 0
  %807 = vmatpush1.bf16.msra.mxu0 %v755
  %808 = vmatprep.subr.bf16.mxu0 0
  %809 = vmatpush1.bf16.msra.mxu0 %v756
  %810 = vmatprep.subr.bf16.mxu0 0
  %811 = vmatpush1.bf16.msra.mxu0 %v757
  %812 = vmatprep.subr.bf16.mxu0 0
  %813 = vmatpush1.bf16.msra.mxu0 %v758
  %814 = vmatprep.subr.bf16.mxu0 0
  %815 = vmatpush1.bf16.msra.mxu0 %v759
  %816 = vmatprep.subr.bf16.mxu0 0
  %817 = vmatpush1.bf16.msra.mxu0 %v760
  %818 = vmatprep.subr.bf16.mxu0 0
  %819 = vmatpush1.bf16.msra.mxu0 %v761
  %820 = vmatprep.subr.bf16.mxu0 0
  %821 = vmatpush1.bf16.msra.mxu0 %v762
  %822 = vmatprep.subr.bf16.mxu0 0
  %823 = vmatpush1.bf16.msra.mxu0 %v763
  %824 = vmatprep.subr.bf16.mxu0 0
  %825 = vmatpush1.bf16.msra.mxu0 %v764
  %826 = vmatprep.subr.bf16.mxu0 0
  %827 = vmatpush1.bf16.msra.mxu0 %v765
  %828 = vmatprep.subr.bf16.mxu0 0
  %829 = vmatpush1.bf16.msra.mxu0 %v766
  %830 = vmatprep.subr.bf16.mxu0 0
  %831 = vmatpush1.bf16.msra.mxu0 %v767
  %832 = vmatprep.subr.bf16.mxu0 0
  %833 = vmatpush1.bf16.msra.mxu0 %v768
  %834 = vmatprep.mubr.bf16.mxu0 %v172
  %835 = vmatmul.mubr.bf16.gmra.mrb[0].mxu0 %v171
  %v836 = vpop.f32.mrb[0].mxu0
  %v837 = vadd.f32 0.0, %v836
  %v838 = vpop.f32.mrb[0].mxu0
  %v839 = vpop.f32.mrb[0].mxu0
  %v840 = vpop.f32.mrb[0].mxu0
  %841 = vdwg.mxu0
  %842 = vmatprep.subr.bf16.mxu0 0
  %843 = vmatpush1.bf16.msra.mxu0 %v769
  %844 = vmatprep.subr.bf16.mxu0 0
  %845 = vmatpush1.bf16.msra.mxu0 %v770
  %846 = vmatprep.subr.bf16.mxu0 0
  %847 = vmatpush1.bf16.msra.mxu0 %v771
  %848 = vmatprep.subr.bf16.mxu0 0
  %849 = vmatpush1.bf16.msra.mxu0 %v772
  %850 = vmatprep.subr.bf16.mxu0 0
  %851 = vmatpush1.bf16.msra.mxu0 %v773
  %852 = vmatprep.subr.bf16.mxu0 0
  %853 = vmatpush1.bf16.msra.mxu0 %v774
  %854 = vmatprep.subr.bf16.mxu0 0
  %855 = vmatpush1.bf16.msra.mxu0 %v775
  %856 = vmatprep.subr.bf16.mxu0 0
  %857 = vmatpush1.bf16.msra.mxu0 %v776
  %858 = vmatprep.subr.bf16.mxu0 0
  %859 = vmatpush1.bf16.msra.mxu0 %v777
  %860 = vmatprep.subr.bf16.mxu0 0
  %861 = vmatpush1.bf16.msra.mxu0 %v778
  %862 = vmatprep.subr.bf16.mxu0 0
  %863 = vmatpush1.bf16.msra.mxu0 %v779
  %864 = vmatprep.subr.bf16.mxu0 0
  %865 = vmatpush1.bf16.msra.mxu0 %v780
  %866 = vmatprep.subr.bf16.mxu0 0
  %867 = vmatpush1.bf16.msra.mxu0 %v781
  %868 = vmatprep.subr.bf16.mxu0 0
  %869 = vmatpush1.bf16.msra.mxu0 %v782
  %870 = vmatprep.subr.bf16.mxu0 0
  %871 = vmatpush1.bf16.msra.mxu0 %v783
  %872 = vmatprep.subr.bf16.mxu0 0
  %873 = vmatpush1.bf16.msra.mxu0 %v784
  %874 = vmatprep.mubr.bf16.mxu0 %v174
  %875 = vmatmul.mubr.bf16.gmra.mrb[0].mxu0 %v173
  %v876 = vpop.f32.mrb[0].mxu0
  %v877 = vadd.f32 %v837, %v876
  %v878 = vpop.f32.mrb[0].mxu0
  %v879 = vpop.f32.mrb[0].mxu0
  %v880 = vpop.f32.mrb[0].mxu0
  %881 = vdwg.mxu0
  %882 = vmatprep.subr.bf16.mxu0 0
  %883 = vmatpush1.bf16.msra.mxu0 %v785
  %884 = vmatprep.subr.bf16.mxu0 0
  %885 = vmatpush1.bf16.msra.mxu0 %v786
  %886 = vmatprep.subr.bf16.mxu0 0
  %887 = vmatpush1.bf16.msra.mxu0 %v787
  %888 = vmatprep.subr.bf16.mxu0 0
  %889 = vmatpush1.bf16.msra.mxu0 %v788
  %890 = vmatprep.subr.bf16.mxu0 0
  %891 = vmatpush1.bf16.msra.mxu0 %v789
  %892 = vmatprep.subr.bf16.mxu0 0
  %893 = vmatpush1.bf16.msra.mxu0 %v790
  %894 = vmatprep.subr.bf16.mxu0 0
  %895 = vmatpush1.bf16.msra.mxu0 %v791
  %896 = vmatprep.subr.bf16.mxu0 0
  %897 = vmatpush1.bf16.msra.mxu0 %v792
  %898 = vmatprep.subr.bf16.mxu0 0
  %899 = vmatpush1.bf16.msra.mxu0 %v793
  %900 = vmatprep.subr.bf16.mxu0 0
  %901 = vmatpush1.bf16.msra.mxu0 %v794
  %902 = vmatprep.subr.bf16.mxu0 0
  %903 = vmatpush1.bf16.msra.mxu0 %v795
  %904 = vmatprep.subr.bf16.mxu0 0
  %905 = vmatpush1.bf16.msra.mxu0 %v796
  %906 = vmatprep.subr.bf16.mxu0 0
  %907 = vmatpush1.bf16.msra.mxu0 %v797
  %908 = vmatprep.subr.bf16.mxu0 0
  %909 = vmatpush1.bf16.msra.mxu0 %v798
  %910 = vmatprep.subr.bf16.mxu0 0
  %911 = vmatpush1.bf16.msra.mxu0 %v799
  %912 = vmatprep.subr.bf16.mxu0 0
  %913 = vmatpush1.bf16.msra.mxu0 %v800
  %914 = vmatprep.mubr.bf16.mxu0 %v176
  %915 = vmatmul.mubr.bf16.gmra.mrb[0].mxu0 %v175
  %v916 = vpop.f32.mrb[0].mxu0
  %v917 = vadd.f32 %v877, %v916
  %v918 = vpop.f32.mrb[0].mxu0
  %v919 = vpop.f32.mrb[0].mxu0
  %v920 = vpop.f32.mrb[0].mxu0
  %921 = vdwg.mxu0
  %v922 = vadd.f32 %v801, %v917
  %vm923 = vcmask 261120
  %924 = vst.msk [vmem:[#allocation2] sm:$0xff] %vm923, %v922
  // Predicated region
  $region26: #{ws_forward.1} parent=0 // pred_check
    %p925 = pneg %p91
  $region27: #{ws_forward.1} parent=0 // pred_check_branch
    %927 = sbr.rel (%p925) target = $region29
  $region28: #{ws_forward.1} parent=0 // pred_region
    %v928 = vld [vmem:[#allocation2] sm:$0xff]
    %v929 = vpack.c.bf16 %v928, %v928
    %v930 = vld [vmem:[%s3] sm:$0xf]
    %v931 = vld [vmem:[%s3 + $0x4] sm:$0xf]
    %v932 = vld [vmem:[%s3 + $0x8] sm:$0xf]
    %v933 = vld [vmem:[%s3 + $0xc] sm:$0xf]
    %p934 = scmp.eq.s32.totalorder 0, 0
    %v935 = vld [vmem:[%s4] sm:$0x1]
    %s936 = scalar_select %p934, 1, 0
    %v937 = vstv %s936
    %vm938 = vcmp.eq.s32.totalorder %v937, 1
    %v939 = vsel %vm938, %v935, 0.0
    %v941 = vlaneseq
    %v942 = vshrl.u32 %v941, 7
    %v943 = vsub.s32 0, %v942
    %v944 = vrot.slane %v939, %v943
    %v950 = vunpack.c.l.b16 %v930
    %v951 = vunpack.c.l.b16 %v931
    %v952 = vunpack.c.l.b16 %v932
    %v953 = vunpack.c.l.b16 %v933
    %v954 = vpack.c.b16 %v951, %v950
    %v955 = vpack.c.b16 %v953, %v952
    %v959 = vsel %vm923, %v929, 0
    %961 = vmatprep.subr.bf16.mxu0 0
    %962 = vmatpush1.bf16.msra.mxu0 %v954
    %963 = vmatprep.subr.bf16.mxu0 0
    %964 = vmatpush1.bf16.msra.mxu0 %v955
    %965 = vmatprep.subr.bf16.mxu0 0
    %966 = vmatpush1.bf16.msra.mxu0 0
    %967 = vmatprep.subr.bf16.mxu0 0
    %968 = vmatpush1.bf16.msra.mxu0 0
    %969 = vmatprep.subr.bf16.mxu0 0
    %970 = vmatpush1.bf16.msra.mxu0 0
    %971 = vmatprep.subr.bf16.mxu0 0
    %972 = vmatpush1.bf16.msra.mxu0 0
    %973 = vmatprep.subr.bf16.mxu0 0
    %974 = vmatpush1.bf16.msra.mxu0 0
    %975 = vmatprep.subr.bf16.mxu0 0
    %976 = vmatpush1.bf16.msra.mxu0 0
    %977 = vmatprep.subr.bf16.mxu0 0
    %978 = vmatpush1.bf16.msra.mxu0 0
    %979 = vmatprep.subr.bf16.mxu0 0
    %980 = vmatpush1.bf16.msra.mxu0 0
    %981 = vmatprep.subr.bf16.mxu0 0
    %982 = vmatpush1.bf16.msra.mxu0 0
    %983 = vmatprep.subr.bf16.mxu0 0
    %984 = vmatpush1.bf16.msra.mxu0 0
    %985 = vmatprep.subr.bf16.mxu0 0
    %986 = vmatpush1.bf16.msra.mxu0 0
    %987 = vmatprep.subr.bf16.mxu0 0
    %988 = vmatpush1.bf16.msra.mxu0 0
    %989 = vmatprep.subr.bf16.mxu0 0
    %990 = vmatpush1.bf16.msra.mxu0 0
    %991 = vmatprep.subr.bf16.mxu0 0
    %992 = vmatpush1.bf16.msra.mxu0 0
    %993 = vmatprep.mubr.bf16.mxu0 0
    %994 = vmatmul.mubr.bf16.gmra.mrb[0].mxu0 %v959
    %v995 = vpop.f32.mrb[0].mxu0
    %v996 = vadd.f32 %v944, %v995
    %v997 = vpop.f32.mrb[0].mxu0
    %v998 = vpop.f32.mrb[0].mxu0
    %v999 = vpop.f32.mrb[0].mxu0
    %1000 = vdwg.mxu0
    %1001 = vst [vmem:[%s5] sm:$0xff] %v996
  $region29: #{ws_forward.1} parent=0 // pred_fallthru
    _
  // Predicated region
  $region30: #{ws_forward.1} parent=0 // pred_check
    _
  $region31: #{ws_forward.1} parent=0 // pred_check_branch
    %1003 = sbr.rel (0) target = $region33
  $region32: #{ws_forward.1} parent=0 // pred_region
    _
  $region33: #{ws_forward.1} parent=0 // pred_fallthru
    _
  // Predicated region
  $region34: #{ws_forward.1} parent=0 // pred_check
    _
  $region35: #{ws_forward.1} parent=0 // pred_check_branch
    %1005 = sbr.rel (0) target = $region37
  $region36: #{ws_forward.1} parent=0 // pred_region
    _
  $region37: #{ws_forward.1} parent=0 // pred_fallthru
    _

</llo_original>
